<compile_context>
chip_gen: v5e
topology: v5e:2x2
jax: 0.10.0
libtpu: 0.0.40
codegen_flags: <defaults>
</compile_context>

<pallas_src>
import functools

import jax
import jax.numpy as jnp
from jax.experimental import pallas as pl
from jax.experimental.pallas import tpu as pltpu


def _coral_kernel(fs_ref, ft_ref, out_ref,
                  sum_s_ref, sum_t_ref, gram_ref, *,
                  n_true: int, d_true: int, tile_n: int,
                  mask_tail: bool, matmul_dtype):
    i = pl.program_id(0)

    @pl.when(i == 0)
    def _init():
        sum_s_ref[...] = jnp.zeros_like(sum_s_ref)
        sum_t_ref[...] = jnp.zeros_like(sum_t_ref)
        gram_ref[...] = jnp.zeros_like(gram_ref)

    fs = fs_ref[...]                           # (tile_n, d), native dtype
    ft = ft_ref[...]

    if mask_tail:
        # Last tile may run past N; its out-of-bounds rows hold stale VMEM.
        valid = n_true - i * tile_n            # scalar (int32)
        row = jax.lax.broadcasted_iota(jnp.int32, fs.shape, 0)
        keep = row < valid
        fs = jnp.where(keep, fs, jnp.zeros_like(fs))
        ft = jnp.where(keep, ft, jnp.zeros_like(ft))

    # Per-feature partial sums, accumulated in f32 (no explicit f32 tile copy).
    sum_s_ref[...] += jnp.sum(fs, axis=0, dtype=jnp.float32, keepdims=True)
    sum_t_ref[...] += jnp.sum(ft, axis=0, dtype=jnp.float32, keepdims=True)

    if matmul_dtype is not None:
        fs_mm = fs.astype(matmul_dtype)
        ft_mm = ft.astype(matmul_dtype)
    else:
        fs_mm, ft_mm = fs, ft

    # Gram difference via two accumulating transposed-LHS matmuls (contract
    # the row axis directly; no .T, no concat temporaries).
    dn = (((0,), (0,)), ((), ()))
    gram_ref[...] += jax.lax.dot_general(
        fs_mm, fs_mm, dimension_numbers=dn, preferred_element_type=jnp.float32)
    gram_ref[...] -= jax.lax.dot_general(
        ft_mm, ft_mm, dimension_numbers=dn, preferred_element_type=jnp.float32)

    @pl.when(i == pl.num_programs(0) - 1)
    def _finalize():
        n = jnp.float32(n_true)
        mean_s = sum_s_ref[...] / n            # (1, d) f32
        mean_t = sum_t_ref[...] / n

        # mean term: (mean_s - mean_t).pow(2).mean()
        mean_diff = jnp.sum((mean_s - mean_t) ** 2) / jnp.float32(d_true)

        # cov_s - cov_t = (G_s - G_t - n*mu_s^T mu_s + n*mu_t^T mu_t) / (n-1)
        # Rank-2 correction as ONE small matmul (K zero-padded to 8 sublanes),
        # no staging scratch.
        zpad = jnp.zeros((6, d_true), jnp.float32)
        mu = jnp.concatenate([mean_s, mean_t, zpad], axis=0)          # (8, d)
        mu_signed = jnp.concatenate([mean_s * (-n), mean_t * n, zpad], axis=0)
        correction = jax.lax.dot_general(
            mu, mu_signed, dimension_numbers=dn,
            preferred_element_type=jnp.float32)                       # (d, d)

        g = (gram_ref[...] + correction) * (1.0 / (n - 1.0))
        cov_diff = jnp.sum(g * g) / jnp.float32(d_true * d_true)

        out_ref[0, 0] = mean_diff + cov_diff


def _round_down(a, b):
    return (a // b) * b


def coral_loss(f_s: jax.Array, f_t: jax.Array, *,
               tile_n: int | None = None,
               matmul_dtype=None) -> jax.Array:
    """Pallas CORAL loss. f_s, f_t: (N, d), same shape/dtype. Returns f32 scalar."""
    assert f_s.shape == f_t.shape and f_s.ndim == 2
    assert f_s.dtype == f_t.dtype
    N, d = f_s.shape
    assert N >= 2, "CORAL divides by (N - 1); need at least 2 samples"

    itemsize = jnp.dtype(f_s.dtype).itemsize
    row_align = {4: 8, 2: 16, 1: 32}.get(itemsize, 8)
    if tile_n is None:
        tile_n = 1024 if itemsize <= 2 else 512

    # Per-generation VMEM budget (v5e/v6e: 128 MiB, v7x: 64 MiB physical).
    try:
        phys = getattr(pltpu.get_tpu_info(), "vmem_capacity_bytes", None) or (64 << 20)
    except Exception:  # pragma: no cover - conservative fallback
        phys = 64 << 20
    cap = (phys * 3) // 4

    def est(tn):
        return (4 * tn * d * itemsize      # 2 inputs x 2 pipeline buffers
                + 3 * d * d * 4            # gram accumulator + matmul/epilogue temps
                + 2 * d * 4)               # column-sum accumulators

    # Tile policy: one full-extent block when N is small and aligned (no tail
    # mask); otherwise row_align-multiple tiles with an in-kernel tail mask.
    if N <= row_align:
        tile_n = N                                        # full-dim block, legal
    elif tile_n >= N and N % row_align == 0:
        tile_n = N
    else:
        tile_n = max(row_align, _round_down(min(tile_n, N), row_align))

    # Auto-shrink tile_n to fit the VMEM budget (instead of clamping the limit).
    while tile_n > row_align and 2 * est(tile_n) > cap:
        new_tn = max(row_align, _round_down(tile_n // 2, row_align))
        if new_tn == tile_n:
            break
        tile_n = new_tn
    # TODO(synk): if d*d*4 alone exceeds `cap`, tile the Gram over feature
    #             columns; not needed at these shapes.

    grid = pl.cdiv(N, tile_n)
    mask_tail = (N % tile_n) != 0
    vmem_limit = int(min(max(2 * est(tile_n), 32 << 20), cap))

    kernel = functools.partial(
        _coral_kernel, n_true=N, d_true=d, tile_n=tile_n,
        mask_tail=mask_tail, matmul_dtype=matmul_dtype)

    out = pl.pallas_call(
        kernel,
        out_shape=jax.ShapeDtypeStruct((1, 1), jnp.float32),
        grid_spec=pltpu.PrefetchScalarGridSpec(
            num_scalar_prefetch=0,
            grid=(grid,),
            in_specs=[
                pl.BlockSpec((tile_n, d), lambda i: (i, 0)),
                pl.BlockSpec((tile_n, d), lambda i: (i, 0)),
            ],
            out_specs=pl.BlockSpec(memory_space=pltpu.SMEM),
            scratch_shapes=[
                pltpu.VMEM((1, d), jnp.float32),      # sum_s
                pltpu.VMEM((1, d), jnp.float32),      # sum_t
                pltpu.VMEM((d, d), jnp.float32),      # gram_s - gram_t
            ],
        ),
        compiler_params=pltpu.CompilerParams(
            dimension_semantics=("arbitrary",),
            vmem_limit_bytes=vmem_limit,
        ),
    )(f_s, f_t)
    return out[0, 0]


def coral_loss_ref(f_s, f_t):
    """Pure-JAX reference mirroring the PyTorch forward."""
    f_s = f_s.astype(jnp.float32)
    f_t = f_t.astype(jnp.float32)
    mean_s = jnp.mean(f_s, axis=0, keepdims=True)
    mean_t = jnp.mean(f_t, axis=0, keepdims=True)
    cent_s = f_s - mean_s
    cent_t = f_t - mean_t
    cov_s = cent_s.T @ cent_s / (f_s.shape[0] - 1)
    cov_t = cent_t.T @ cent_t / (f_t.shape[0] - 1)
    mean_diff = jnp.mean((mean_s - mean_t) ** 2)
    cov_diff = jnp.mean((cov_s - cov_t) ** 2)
    return mean_diff + cov_diff


if __name__ == "__main__":
    key = jax.random.PRNGKey(0)
    k1, k2, k3, k4, k5, k6 = jax.random.split(key, 6)

    # 1) small single-block path: (N, d) = (8, 32), f32
    f_s = jax.random.normal(k1, (8, 32), dtype=jnp.float32)
    f_t = jax.random.normal(k2, (8, 32), dtype=jnp.float32) * 1.5 + 0.3
    loss = coral_loss(f_s, f_t)
    jax.block_until_ready(loss)
    ref = coral_loss_ref(f_s, f_t)
    assert jnp.allclose(loss, ref, rtol=1e-4, atol=1e-6), (loss, ref)

    # 2) multi-tile path with a masked tail tile and unaligned d: (20, 96)
    g_s = jax.random.normal(k3, (20, 96), dtype=jnp.float32)
    g_t = jax.random.normal(k4, (20, 96), dtype=jnp.float32) * 0.7 - 0.2
    loss2 = coral_loss(g_s, g_t, tile_n=16)
    jax.block_until_ready(loss2)
    ref2 = coral_loss_ref(g_s, g_t)
    assert jnp.allclose(loss2, ref2, rtol=1e-4, atol=1e-6), (loss2, ref2)

    # 3) bf16 inputs, 16-row packed-sublane tiles, multi-tile, no tail: (48, 64)
    h_s = jax.random.normal(k5, (48, 64), dtype=jnp.bfloat16)
    h_t = (jax.random.normal(k6, (48, 64), dtype=jnp.bfloat16) * 1.2 + 0.1
           ).astype(jnp.bfloat16)
    loss3 = coral_loss(h_s, h_t, tile_n=16)
    jax.block_until_ready(loss3)
    ref3 = coral_loss_ref(h_s, h_t)
    assert jnp.allclose(loss3, ref3, rtol=5e-3, atol=1e-4), (loss3, ref3)

    print("KERNEL_OK")
</pallas_src>

<mosaic_0001>
module attributes {stable_mosaic.version = 11 : i64} {
  func.func @_coral_kernel(%arg0: i32, %arg1: memref<8x32xf32, #tpu.memory_space<vmem>>, %arg2: memref<8x32xf32, #tpu.memory_space<vmem>>, %arg3: memref<1x1xf32, #tpu.memory_space<smem>>, %arg4: memref<1x32xf32, #tpu.memory_space<vmem>>, %arg5: memref<1x32xf32, #tpu.memory_space<vmem>>, %arg6: memref<32x32xf32, #tpu.memory_space<vmem>>) attributes {dimension_semantics = [#tpu.dimension_semantics<arbitrary>], iteration_bounds = array<i64: 1>, scalar_prefetch = 0 : i64, scratch_operands = 3 : i64, tpu.core_type = #tpu.core_type<tc>, window_params = [{transform_indices = @transform_0, window_bounds = array<i64: 8, 32>}, {transform_indices = @transform_1, window_bounds = array<i64: 8, 32>}, {transform_indices = @transform_2, window_bounds = array<i64: 1, 1>}]} {
    %c0_i32 = arith.constant 0 : i32
    %0 = arith.cmpi eq, %arg0, %c0_i32 : i32
    %1 = arith.extui %0 : i1 to i32
    %c0_i32_0 = arith.constant 0 : i32
    %2 = arith.cmpi ne, %1, %c0_i32_0 : i32
    scf.if %2 {
      %cst_25 = arith.constant 0.000000e+00 : f32
      %26 = vector.broadcast %cst_25 : f32 to vector<1x32xf32>
      %c0_26 = arith.constant 0 : index
      %c0_27 = arith.constant 0 : index
      %27 = vector.load %arg4[%c0_26, %c0_27] : memref<1x32xf32, #tpu.memory_space<vmem>>, vector<1x32xf32>
      tpu.vector_store %arg4[%c0_26, %c0_27], %26 {strides = array<i32>} : memref<1x32xf32, #tpu.memory_space<vmem>>, vector<1x32xf32>,
      %cst_28 = arith.constant 0.000000e+00 : f32
      %28 = vector.broadcast %cst_28 : f32 to vector<1x32xf32>
      %c0_29 = arith.constant 0 : index
      %c0_30 = arith.constant 0 : index
      %29 = vector.load %arg5[%c0_29, %c0_30] : memref<1x32xf32, #tpu.memory_space<vmem>>, vector<1x32xf32>
      tpu.vector_store %arg5[%c0_29, %c0_30], %28 {strides = array<i32>} : memref<1x32xf32, #tpu.memory_space<vmem>>, vector<1x32xf32>,
      %cst_31 = arith.constant 0.000000e+00 : f32
      %30 = vector.broadcast %cst_31 : f32 to vector<32x32xf32>
      %c0_32 = arith.constant 0 : index
      %c0_33 = arith.constant 0 : index
      %31 = vector.load %arg6[%c0_32, %c0_33] : memref<32x32xf32, #tpu.memory_space<vmem>>, vector<32x32xf32>
      tpu.vector_store %arg6[%c0_32, %c0_33], %30 {strides = array<i32>} : memref<32x32xf32, #tpu.memory_space<vmem>>, vector<32x32xf32>,
    } else {
    }
    %c0 = arith.constant 0 : index
    %c0_1 = arith.constant 0 : index
    %3 = vector.load %arg1[%c0, %c0_1] : memref<8x32xf32, #tpu.memory_space<vmem>>, vector<8x32xf32>
    %c0_2 = arith.constant 0 : index
    %c0_3 = arith.constant 0 : index
    %4 = vector.load %arg2[%c0_2, %c0_3] : memref<8x32xf32, #tpu.memory_space<vmem>>, vector<8x32xf32>
    %c0_4 = arith.constant 0 : index
    %c0_5 = arith.constant 0 : index
    %5 = vector.load %arg4[%c0_4, %c0_5] : memref<1x32xf32, #tpu.memory_space<vmem>>, vector<1x32xf32>
    %cst = arith.constant dense<0.000000e+00> : vector<32xf32>
    %6 = vector.multi_reduction <add>, %3, %cst [0] : vector<8x32xf32> to vector<32xf32>
    %7 = vector.shape_cast %6 : vector<32xf32> to vector<1x32xf32>
    %8 = arith.addf %5, %7 : vector<1x32xf32>
    %c0_6 = arith.constant 0 : index
    %c0_7 = arith.constant 0 : index
    %9 = vector.load %arg4[%c0_6, %c0_7] : memref<1x32xf32, #tpu.memory_space<vmem>>, vector<1x32xf32>
    tpu.vector_store %arg4[%c0_6, %c0_7], %8 {strides = array<i32>} : memref<1x32xf32, #tpu.memory_space<vmem>>, vector<1x32xf32>,
    %c0_8 = arith.constant 0 : index
    %c0_9 = arith.constant 0 : index
    %10 = vector.load %arg5[%c0_8, %c0_9] : memref<1x32xf32, #tpu.memory_space<vmem>>, vector<1x32xf32>
    %cst_10 = arith.constant dense<0.000000e+00> : vector<32xf32>
    %11 = vector.multi_reduction <add>, %4, %cst_10 [0] : vector<8x32xf32> to vector<32xf32>
    %12 = vector.shape_cast %11 : vector<32xf32> to vector<1x32xf32>
    %13 = arith.addf %10, %12 : vector<1x32xf32>
    %c0_11 = arith.constant 0 : index
    %c0_12 = arith.constant 0 : index
    %14 = vector.load %arg5[%c0_11, %c0_12] : memref<1x32xf32, #tpu.memory_space<vmem>>, vector<1x32xf32>
    tpu.vector_store %arg5[%c0_11, %c0_12], %13 {strides = array<i32>} : memref<1x32xf32, #tpu.memory_space<vmem>>, vector<1x32xf32>,
    %c0_13 = arith.constant 0 : index
    %c0_14 = arith.constant 0 : index
    %15 = vector.load %arg6[%c0_13, %c0_14] : memref<32x32xf32, #tpu.memory_space<vmem>>, vector<32x32xf32>
    %cst_15 = arith.constant dense<0.000000e+00> : vector<32x32xf32>
    %16 = tpu.matmul %3, %3, %cst_15 {dimension_numbers = #tpu.dot_dimension_numbers<[0], [0], [1], [1], [0, 1, 1, 1], [], []>} : vector<8x32xf32>, vector<8x32xf32>, vector<32x32xf32> -> vector<32x32xf32>
    %17 = arith.addf %15, %16 : vector<32x32xf32>
    %c0_16 = arith.constant 0 : index
    %c0_17 = arith.constant 0 : index
    %18 = vector.load %arg6[%c0_16, %c0_17] : memref<32x32xf32, #tpu.memory_space<vmem>>, vector<32x32xf32>
    tpu.vector_store %arg6[%c0_16, %c0_17], %17 {strides = array<i32>} : memref<32x32xf32, #tpu.memory_space<vmem>>, vector<32x32xf32>,
    %c0_18 = arith.constant 0 : index
    %c0_19 = arith.constant 0 : index
    %19 = vector.load %arg6[%c0_18, %c0_19] : memref<32x32xf32, #tpu.memory_space<vmem>>, vector<32x32xf32>
    %cst_20 = arith.constant dense<0.000000e+00> : vector<32x32xf32>
    %20 = tpu.matmul %4, %4, %cst_20 {dimension_numbers = #tpu.dot_dimension_numbers<[0], [0], [1], [1], [0, 1, 1, 1], [], []>} : vector<8x32xf32>, vector<8x32xf32>, vector<32x32xf32> -> vector<32x32xf32>
    %21 = arith.subf %19, %20 : vector<32x32xf32>
    %c0_21 = arith.constant 0 : index
    %c0_22 = arith.constant 0 : index
    %22 = vector.load %arg6[%c0_21, %c0_22] : memref<32x32xf32, #tpu.memory_space<vmem>>, vector<32x32xf32>
    tpu.vector_store %arg6[%c0_21, %c0_22], %21 {strides = array<i32>} : memref<32x32xf32, #tpu.memory_space<vmem>>, vector<32x32xf32>,
    %c0_i32_23 = arith.constant 0 : i32
    %23 = arith.cmpi eq, %arg0, %c0_i32_23 : i32
    %24 = arith.extui %23 : i1 to i32
    %c0_i32_24 = arith.constant 0 : i32
    %25 = arith.cmpi ne, %24, %c0_i32_24 : i32
    scf.if %25 {
      %c0_25 = arith.constant 0 : index
      %c0_26 = arith.constant 0 : index
      %26 = vector.load %arg4[%c0_25, %c0_26] : memref<1x32xf32, #tpu.memory_space<vmem>>, vector<1x32xf32>
      %cst_27 = arith.constant 8.000000e+00 : f32
      %27 = vector.broadcast %cst_27 : f32 to vector<1x32xf32>
      %28 = arith.divf %26, %27 : vector<1x32xf32>
      %c0_28 = arith.constant 0 : index
      %c0_29 = arith.constant 0 : index
      %29 = vector.load %arg5[%c0_28, %c0_29] : memref<1x32xf32, #tpu.memory_space<vmem>>, vector<1x32xf32>
      %cst_30 = arith.constant 8.000000e+00 : f32
      %30 = vector.broadcast %cst_30 : f32 to vector<1x32xf32>
      %31 = arith.divf %29, %30 : vector<1x32xf32>
      %32 = arith.subf %28, %31 : vector<1x32xf32>
      %33 = arith.mulf %32, %32 : vector<1x32xf32>
      %34 = vector.shape_cast %33 : vector<1x32xf32> to vector<1x1x32xf32>
      %cst_31 = arith.constant dense<0.000000e+00> : vector<1xf32>
      %35 = vector.multi_reduction <add>, %34, %cst_31 [1, 2] : vector<1x1x32xf32> to vector<1xf32>
      %36 = vector.shape_cast %35 : vector<1xf32> to vector<1x1x1xf32>
      %37 = vector.extract %36[0, 0, 0] : f32 from vector<1x1x1xf32>
      %cst_32 = arith.constant 3.200000e+01 : f32
      %38 = arith.divf %37, %cst_32 : f32
      %cst_33 = arith.constant 0.000000e+00 : f32
      %39 = vector.broadcast %cst_33 : f32 to vector<6x32xf32>
      %40 = tpu.concatenate %28, %31, %39 in 0 : vector<1x32xf32>, vector<1x32xf32>, vector<6x32xf32> -> vector<8x32xf32>
      %cst_34 = arith.constant 0.000000e+00 : f32
      %cst_35 = arith.constant 8.000000e+00 : f32
      %41 = arith.subf %cst_34, %cst_35 : f32
      %42 = vector.broadcast %41 : f32 to vector<1x32xf32>
      %43 = arith.mulf %28, %42 : vector<1x32xf32>
      %cst_36 = arith.constant 8.000000e+00 : f32
      %44 = vector.broadcast %cst_36 : f32 to vector<1x32xf32>
      %45 = arith.mulf %31, %44 : vector<1x32xf32>
      %46 = tpu.concatenate %43, %45, %39 in 0 : vector<1x32xf32>, vector<1x32xf32>, vector<6x32xf32> -> vector<8x32xf32>
      %cst_37 = arith.constant dense<0.000000e+00> : vector<32x32xf32>
      %47 = tpu.matmul %40, %46, %cst_37 {dimension_numbers = #tpu.dot_dimension_numbers<[0], [0], [1], [1], [0, 1, 1, 1], [], []>} : vector<8x32xf32>, vector<8x32xf32>, vector<32x32xf32> -> vector<32x32xf32>
      %c0_38 = arith.constant 0 : index
      %c0_39 = arith.constant 0 : index
      %48 = vector.load %arg6[%c0_38, %c0_39] : memref<32x32xf32, #tpu.memory_space<vmem>>, vector<32x32xf32>
      %49 = arith.addf %48, %47 : vector<32x32xf32>
      %cst_40 = arith.constant 8.000000e+00 : f32
      %cst_41 = arith.constant 1.000000e+00 : f32
      %50 = arith.subf %cst_40, %cst_41 : f32
      %cst_42 = arith.constant 1.000000e+00 : f32
      %51 = arith.divf %cst_42, %50 : f32
      %52 = vector.broadcast %51 : f32 to vector<32x32xf32>
      %53 = arith.mulf %49, %52 : vector<32x32xf32>
      %54 = arith.mulf %53, %53 : vector<32x32xf32>
      %55 = vector.shape_cast %54 : vector<32x32xf32> to vector<1x32x32xf32>
      %cst_43 = arith.constant dense<0.000000e+00> : vector<1xf32>
      %56 = vector.multi_reduction <add>, %55, %cst_43 [1, 2] : vector<1x32x32xf32> to vector<1xf32>
      %57 = vector.shape_cast %56 : vector<1xf32> to vector<1x1x1xf32>
      %58 = vector.extract %57[0, 0, 0] : f32 from vector<1x1x1xf32>
      %cst_44 = arith.constant 1.024000e+03 : f32
      %59 = arith.divf %58, %cst_44 : f32
      %60 = arith.addf %38, %59 : f32
      %c0_45 = arith.constant 0 : index
      %c0_46 = arith.constant 0 : index
      %61 = memref.load %arg3[%c0_45, %c0_46] : memref<1x1xf32, #tpu.memory_space<smem>>
      memref.store %60, %arg3[%c0_45, %c0_46] : memref<1x1xf32, #tpu.memory_space<smem>>
    } else {
    }
    return
  }
  func.func @transform_0(%arg0: i32) -> (i32, i32) {
    %c0_i32 = arith.constant 0 : i32
    %c0_i32_0 = arith.constant 0 : i32
    return %arg0, %c0_i32 : i32, i32
  }
  func.func @transform_1(%arg0: i32) -> (i32, i32) {
    %c0_i32 = arith.constant 0 : i32
    %c0_i32_0 = arith.constant 0 : i32
    return %arg0, %c0_i32 : i32, i32
  }
  func.func @transform_2(%arg0: i32) -> (i32, i32) {
    %c0_i32 = arith.constant 0 : i32
    %c0_i32_0 = arith.constant 0 : i32
    %c0_i32_1 = arith.constant 0 : i32
    return %c0_i32, %c0_i32_0 : i32, i32
  }
}

</mosaic_0001>

<llo_original>
// kernel: tpu_custom_call.1
$region0: #{tpu_custom_call.1}
  #allocation0 [shape = 'u32[]', space=smem, size = 0x4, offset = 0x4, fixed_abs, tag = 'smem constant byte address 0x4 - core index']
  #allocation1 [shape = 'u32[72,128]{1,0:T(1,128)}', space=vmem, size = 0x9000, scoped, tag = 'internal scratch']
  #allocation2 [shape = 'f32[1,32]{1,0:T(1,128)}', space=vmem, size = 0x200, scoped, tag = 'scratch operand']
  #allocation3 [shape = 'f32[1,32]{1,0:T(1,128)}', space=vmem, size = 0x200, scoped, tag = 'scratch operand']
  #allocation4 [shape = 'f32[32,32]{1,0:T(8,128)}', space=vmem, size = 0x4000, scoped, tag = 'scratch operand']
  %s0 = inlined_call_operand.hbm [shape: f32[8,32], index: 0, kind: input, shape index: {}]
  %s1 = inlined_call_operand.hbm [shape: f32[8,32], index: 1, kind: input, shape index: {}]
  %s2 = inlined_call_operand.hbm [shape: f32[1,1], index: 2, kind: output, shape index: {}]
  %s3 = sld [smem:[#allocation0]]
  $region34: #{tpu_custom_call.1} parent=0
    _
  %s5 = ssub.s32 1, %s3
  %s6 = scalar_select 0, %s5, %s3
  $region1: #{tpu_custom_call.1} parent=0
    #allocation5 [shape = 'u8[4096]{0}', space=vmem, size = 0x1000, scoped, tag = 'input window, operand 0, single buffered']
    #allocation6 [shape = 's32[1]{0}', space=sflag, size = 0x4, scoped, tag = 'scoped memory for tpu_custom_call.1']
    #allocation7 [shape = 's32[1]{0}', space=sflag, size = 0x4, scoped, tag = 'scoped memory for tpu_custom_call.1']
    #allocation8 [shape = 'u8[4096]{0}', space=vmem, size = 0x1000, scoped, tag = 'input window, operand 1, single buffered']
    #allocation9 [shape = 's32[1]{0}', space=sflag, size = 0x4, scoped, tag = 'scoped memory for tpu_custom_call.1']
    #allocation10 [shape = 'u8[512]{0}', space=smem, size = 0x200, scoped, tag = 'output window, operand 0, single buffered']
    %7 = vsyncpa [#allocation6], 0
    %8 = vsyncpa [#allocation9], 0
    %9 = vsyncpa [#allocation7], 0
    // Predicated region
    $region2: #{tpu_custom_call.1} parent=1 // pred_check
      _
    $region3: #{tpu_custom_call.1} parent=1 // pred_check_branch
      %11 = sbr.rel (0) target = $region5
    $region4: #{tpu_custom_call.1} parent=1 // pred_region
      %13 = vsyncadd [#allocation6], 0
      %s15 = sshll.u32 %s0, 4
      %s16 = int_to_ptr.hbm [resolvable:$true] %s15
      %s17 = sshll.u32 [#allocation5], 4
      %s18 = int_to_ptr.vmem [resolvable:$true] %s17
      %20 = dma.hbm_to_vmem [thread:$0]  %s16, 128, %s18, [#allocation6]
    $region5: #{tpu_custom_call.1} parent=1 // pred_fallthru
      _
    // Predicated region
    $region6: #{tpu_custom_call.1} parent=1 // pred_check
      _
    $region7: #{tpu_custom_call.1} parent=1 // pred_check_branch
      %22 = sbr.rel (0) target = $region9
    $region8: #{tpu_custom_call.1} parent=1 // pred_region
      %24 = vsyncadd [#allocation9], 0
      %s26 = sshll.u32 %s1, 4
      %s27 = int_to_ptr.hbm [resolvable:$true] %s26
      %s28 = sshll.u32 [#allocation8], 4
      %s29 = int_to_ptr.vmem [resolvable:$true] %s28
      %31 = dma.hbm_to_vmem [thread:$0]  %s27, 128, %s29, [#allocation9]
    $region9: #{tpu_custom_call.1} parent=1 // pred_fallthru
      _
    // Predicated region
    $region10: #{tpu_custom_call.1} parent=1 // pred_check
      _
    $region11: #{tpu_custom_call.1} parent=1 // pred_check_branch
      %33 = sbr.rel (0) target = $region13
    $region12: #{tpu_custom_call.1} parent=1 // pred_region
      %35 = dma.done [#allocation6], 128
    $region13: #{tpu_custom_call.1} parent=1 // pred_fallthru
      _
    // Predicated region
    $region14: #{tpu_custom_call.1} parent=1 // pred_check
      _
    $region15: #{tpu_custom_call.1} parent=1 // pred_check_branch
      %37 = sbr.rel (0) target = $region17
    $region16: #{tpu_custom_call.1} parent=1 // pred_region
      %39 = dma.done [#allocation9], 128
    $region17: #{tpu_custom_call.1} parent=1 // pred_fallthru
      _
    %p40 = scmp.eq.s32.totalorder 0, 0
    // Predicated region
    $region18: #{tpu_custom_call.1} parent=1 // pred_check
      %p41 = pneg %p40
    $region19: #{tpu_custom_call.1} parent=1 // pred_check_branch
      %43 = sbr.rel (%p41) target = $region21
    $region20: #{tpu_custom_call.1} parent=1 // pred_region
      %vm44 = vcmask 253952
      %45 = vst.msk [vmem:[#allocation2] sm:$0x1] %vm44, 0.0
      %46 = vst.msk [vmem:[#allocation3] sm:$0x1] %vm44, 0.0
      %vm47 = vcmask 261120
      %48 = vst.msk [vmem:[#allocation4] sm:$0xff] %vm47, 0.0
      %49 = vst.msk [vmem:[#allocation4 + $0x8] sm:$0xff] %vm47, 0.0
      %50 = vst.msk [vmem:[#allocation4 + $0x10] sm:$0xff] %vm47, 0.0
      %51 = vst.msk [vmem:[#allocation4 + $0x18] sm:$0xff] %vm47, 0.0
    $region21: #{tpu_custom_call.1} parent=1 // pred_fallthru
      _
    %v52 = vld [vmem:[#allocation5] sm:$0xff]
    %v53 = vld [vmem:[#allocation8] sm:$0xff]
    %v54 = vld [vmem:[#allocation2] sm:$0x1]
    %vm55 = vcmask 261120
    %v56 = vsel %vm55, %v52, 0.0
    %v57 = vrot.slane %v56, 4
    %v58 = vadd.f32 %v56, %v57
    %v59 = vrot.slane %v58, 2
    %v60 = vadd.f32 %v58, %v59
    %v61 = vrot.slane %v60, 1
    %v62 = vadd.f32 %v60, %v61
    %v63 = vadd.f32 %v54, %v62
    %vm64 = vcmask 253952
    %65 = vst.msk [vmem:[#allocation2] sm:$0x1] %vm64, %v63
    %v66 = vld [vmem:[#allocation3] sm:$0x1]
    %v67 = vsel %vm55, %v53, 0.0
    %v68 = vrot.slane %v67, 4
    %v69 = vadd.f32 %v67, %v68
    %v70 = vrot.slane %v69, 2
    %v71 = vadd.f32 %v69, %v70
    %v72 = vrot.slane %v71, 1
    %v73 = vadd.f32 %v71, %v72
    %v74 = vadd.f32 %v66, %v73
    %75 = vst.msk [vmem:[#allocation3] sm:$0x1] %vm64, %v74
    %v76 = vld [vmem:[#allocation4] sm:$0xff]
    %v77 = vld [vmem:[#allocation4 + $0x8] sm:$0xff]
    %v78 = vld [vmem:[#allocation4 + $0x10] sm:$0xff]
    %v79 = vld [vmem:[#allocation4 + $0x18] sm:$0xff]
    %80 = vxpose.xlu0.b32.start [1/16] %v52, 128
    %81 = vxpose.xlu0.b32.cont [2/16] 0.0, 128
    %82 = vxpose.xlu0.b32.cont [3/16] 0.0, 128
    %83 = vxpose.xlu0.b32.cont [4/16] 0.0, 128
    %84 = vxpose.xlu0.b32.cont [5/16] 0.0, 128
    %85 = vxpose.xlu0.b32.cont [6/16] 0.0, 128
    %86 = vxpose.xlu0.b32.cont [7/16] 0.0, 128
    %87 = vxpose.xlu0.b32.cont [8/16] 0.0, 128
    %88 = vxpose.xlu0.b32.cont [9/16] 0.0, 128
    %89 = vxpose.xlu0.b32.cont [10/16] 0.0, 128
    %90 = vxpose.xlu0.b32.cont [11/16] 0.0, 128
    %91 = vxpose.xlu0.b32.cont [12/16] 0.0, 128
    %92 = vxpose.xlu0.b32.cont [13/16] 0.0, 128
    %93 = vxpose.xlu0.b32.cont [14/16] 0.0, 128
    %94 = vxpose.xlu0.b32.cont [15/16] 0.0, 128
    %95 = vxpose.xlu0.b32.end [16/16] 0.0, 128
    %v96 = vpop.trf.xlu0
    %v97 = vpop.trf.xlu0
    %v98 = vpop.trf.xlu0
    %v99 = vpop.trf.xlu0
    %v100 = vpop.trf.xlu0
    %v101 = vpop.trf.xlu0
    %v102 = vpop.trf.xlu0
    %v103 = vpop.trf.xlu0
    %v104 = vpop.trf.xlu0
    %v105 = vpop.trf.xlu0
    %v106 = vpop.trf.xlu0
    %v107 = vpop.trf.xlu0
    %v108 = vpop.trf.xlu0
    %v109 = vpop.trf.xlu0
    %v110 = vpop.trf.xlu0
    %v111 = vpop.trf.xlu0
    %vm112 = vcmask 64512
    %v114 = vsel %vm112, %v96, 0
    %v117 = vsel %vm112, %v97, 0
    %v120 = vsel %vm112, %v98, 0
    %v123 = vsel %vm112, %v99, 0
    %125 = vmatpush.msra.mxu0 0.0
    %126 = vmatpush.msra.mxu0 0.0
    %127 = vmatpush.msra.mxu0 0.0
    %128 = vmatpush.msra.mxu0 0.0
    %129 = vmatpush.msra.mxu0 0.0
    %130 = vmatpush.msra.mxu0 0.0
    %131 = vmatpush.msra.mxu0 0.0
    %132 = vmatpush.msra.mxu0 0.0
    %133 = vmatpush.msra.mxu0 0.0
    %134 = vmatpush.msra.mxu0 0.0
    %135 = vmatpush.msra.mxu0 0.0
    %136 = vmatpush.msra.mxu0 0.0
    %137 = vmatpush.msra.mxu0 0.0
    %138 = vmatpush.msra.mxu0 0.0
    %139 = vmatpush.msra.mxu0 0.0
    %140 = vmatpush.msra.mxu0 %v52
    %141 = vmatmul.f32.gmra.mxu0 %v114
    %v142 = vpop.f32.mrf.mxu0
    %v143 = vadd.f32 0.0, %v142
    %144 = vmatmul.f32.gmra.mxu0 %v117
    %v145 = vpop.f32.mrf.mxu0
    %v146 = vadd.f32 0.0, %v145
    %147 = vmatmul.f32.gmra.mxu0 %v120
    %v148 = vpop.f32.mrf.mxu0
    %v149 = vadd.f32 0.0, %v148
    %150 = vmatmul.f32.gmra.mxu0 %v123
    %v151 = vpop.f32.mrf.mxu0
    %v152 = vadd.f32 0.0, %v151
    %153 = vdwg.mxu0
    %v154 = vadd.f32 %v76, %v143
    %v155 = vadd.f32 %v77, %v146
    %v156 = vadd.f32 %v78, %v149
    %v157 = vadd.f32 %v79, %v152
    %158 = vst.msk [vmem:[#allocation4] sm:$0xff] %vm55, %v154
    %159 = vst.msk [vmem:[#allocation4 + $0x8] sm:$0xff] %vm55, %v155
    %160 = vst.msk [vmem:[#allocation4 + $0x10] sm:$0xff] %vm55, %v156
    %161 = vst.msk [vmem:[#allocation4 + $0x18] sm:$0xff] %vm55, %v157
    %v162 = vld [vmem:[#allocation4] sm:$0xff]
    %v163 = vld [vmem:[#allocation4 + $0x8] sm:$0xff]
    %v164 = vld [vmem:[#allocation4 + $0x10] sm:$0xff]
    %v165 = vld [vmem:[#allocation4 + $0x18] sm:$0xff]
    %166 = vxpose.xlu0.b32.start [1/16] %v53, 128
    %167 = vxpose.xlu0.b32.cont [2/16] 0.0, 128
    %168 = vxpose.xlu0.b32.cont [3/16] 0.0, 128
    %169 = vxpose.xlu0.b32.cont [4/16] 0.0, 128
    %170 = vxpose.xlu0.b32.cont [5/16] 0.0, 128
    %171 = vxpose.xlu0.b32.cont [6/16] 0.0, 128
    %172 = vxpose.xlu0.b32.cont [7/16] 0.0, 128
    %173 = vxpose.xlu0.b32.cont [8/16] 0.0, 128
    %174 = vxpose.xlu0.b32.cont [9/16] 0.0, 128
    %175 = vxpose.xlu0.b32.cont [10/16] 0.0, 128
    %176 = vxpose.xlu0.b32.cont [11/16] 0.0, 128
    %177 = vxpose.xlu0.b32.cont [12/16] 0.0, 128
    %178 = vxpose.xlu0.b32.cont [13/16] 0.0, 128
    %179 = vxpose.xlu0.b32.cont [14/16] 0.0, 128
    %180 = vxpose.xlu0.b32.cont [15/16] 0.0, 128
    %181 = vxpose.xlu0.b32.end [16/16] 0.0, 128
    %v182 = vpop.trf.xlu0
    %v183 = vpop.trf.xlu0
    %v184 = vpop.trf.xlu0
    %v185 = vpop.trf.xlu0
    %v186 = vpop.trf.xlu0
    %v187 = vpop.trf.xlu0
    %v188 = vpop.trf.xlu0
    %v189 = vpop.trf.xlu0
    %v190 = vpop.trf.xlu0
    %v191 = vpop.trf.xlu0
    %v192 = vpop.trf.xlu0
    %v193 = vpop.trf.xlu0
    %v194 = vpop.trf.xlu0
    %v195 = vpop.trf.xlu0
    %v196 = vpop.trf.xlu0
    %v197 = vpop.trf.xlu0
    %v199 = vsel %vm112, %v182, 0
    %v202 = vsel %vm112, %v183, 0
    %v205 = vsel %vm112, %v184, 0
    %v208 = vsel %vm112, %v185, 0
    %210 = vmatpush.msra.mxu0 0.0
    %211 = vmatpush.msra.mxu0 0.0
    %212 = vmatpush.msra.mxu0 0.0
    %213 = vmatpush.msra.mxu0 0.0
    %214 = vmatpush.msra.mxu0 0.0
    %215 = vmatpush.msra.mxu0 0.0
    %216 = vmatpush.msra.mxu0 0.0
    %217 = vmatpush.msra.mxu0 0.0
    %218 = vmatpush.msra.mxu0 0.0
    %219 = vmatpush.msra.mxu0 0.0
    %220 = vmatpush.msra.mxu0 0.0
    %221 = vmatpush.msra.mxu0 0.0
    %222 = vmatpush.msra.mxu0 0.0
    %223 = vmatpush.msra.mxu0 0.0
    %224 = vmatpush.msra.mxu0 0.0
    %225 = vmatpush.msra.mxu0 %v53
    %226 = vmatmul.f32.gmra.mxu0 %v199
    %v227 = vpop.f32.mrf.mxu0
    %v228 = vadd.f32 0.0, %v227
    %229 = vmatmul.f32.gmra.mxu0 %v202
    %v230 = vpop.f32.mrf.mxu0
    %v231 = vadd.f32 0.0, %v230
    %232 = vmatmul.f32.gmra.mxu0 %v205
    %v233 = vpop.f32.mrf.mxu0
    %v234 = vadd.f32 0.0, %v233
    %235 = vmatmul.f32.gmra.mxu0 %v208
    %v236 = vpop.f32.mrf.mxu0
    %v237 = vadd.f32 0.0, %v236
    %238 = vdwg.mxu0
    %v239 = vsub.f32 %v162, %v228
    %v240 = vsub.f32 %v163, %v231
    %v241 = vsub.f32 %v164, %v234
    %v242 = vsub.f32 %v165, %v237
    %243 = vst.msk [vmem:[#allocation4] sm:$0xff] %vm55, %v239
    %244 = vst.msk [vmem:[#allocation4 + $0x8] sm:$0xff] %vm55, %v240
    %245 = vst.msk [vmem:[#allocation4 + $0x10] sm:$0xff] %vm55, %v241
    %246 = vst.msk [vmem:[#allocation4 + $0x18] sm:$0xff] %vm55, %v242
    // Predicated region
    $region22: #{tpu_custom_call.1} parent=1 // pred_check
      %p247 = pneg %p40
    $region23: #{tpu_custom_call.1} parent=1 // pred_check_branch
      %249 = sbr.rel (%p247) target = $region25
    $region24: #{tpu_custom_call.1} parent=1 // pred_region
      %v250 = vld [vmem:[#allocation2] sm:$0x1]
      %v251 = vrcp.pop 8.0
      %v252 = vmul.f32 8.0, %v251
      %v253 = vsub.f32 1.0, %v252
      %v254 = vmul.f32 %v251, %v253
      %v255 = vadd.f32 %v251, %v254
      %vm256 = vweird.f32 %v251
      %v257 = vsel %vm256, %v251, %v255
      %v258 = vmul.f32 %v250, %v257
      %v259 = vld [vmem:[#allocation3] sm:$0x1]
      %v260 = vmul.f32 %v259, %v257
      %v261 = vsub.f32 %v258, %v260
      %v262 = vmul.f32 %v261, %v261
      %v263 = vsel %vm64, %v262, 0.0
      %264 = vadd.xlane.f32.xlu0 %v263
      %v265 = vpop.xlane.xlu0 %264
      %v266 = vrot.slane %v265, 4
      %v267 = vadd.f32 %v265, %v266
      %v268 = vrot.slane %v267, 2
      %v269 = vadd.f32 %v267, %v268
      %v270 = vrot.slane %v269, 1
      %v271 = vadd.f32 %v269, %v270
      %s272 = vtos %v271
      %v273 = vrcp.pop 32.0
      %v274 = vmul.f32 32.0, %v273
      %v275 = vsub.f32 1.0, %v274
      %v276 = vmul.f32 %v273, %v275
      %v277 = vadd.f32 %v273, %v276
      %vm278 = vweird.f32 %v273
      %v279 = vsel %vm278, %v273, %v277
      %s280 = vtos %v279
      %s281 = smul.f32 %s272, %s280
      %v283 = vperm.slane %v260, 0
      %vm285 = vcmask 1040384
      %v286 = vsel %vm285, %v258, %v283
      %vm287 = vcmask 1041408
      %v288 = vsel %vm287, %v286, 0.0
      %v289 = vmul.f32 %v258, -8.0
      %v290 = vmul.f32 %v260, 8.0
      %v292 = vperm.slane %v290, 0
      %v294 = vsel %vm285, %v289, %v292
      %v295 = vsel %vm287, %v294, 0.0
      %296 = vxpose.xlu0.b32.start [1/16] %v288, 128
      %297 = vxpose.xlu0.b32.cont [2/16] 0.0, 128
      %298 = vxpose.xlu0.b32.cont [3/16] 0.0, 128
      %299 = vxpose.xlu0.b32.cont [4/16] 0.0, 128
      %300 = vxpose.xlu0.b32.cont [5/16] 0.0, 128
      %301 = vxpose.xlu0.b32.cont [6/16] 0.0, 128
      %302 = vxpose.xlu0.b32.cont [7/16] 0.0, 128
      %303 = vxpose.xlu0.b32.cont [8/16] 0.0, 128
      %304 = vxpose.xlu0.b32.cont [9/16] 0.0, 128
      %305 = vxpose.xlu0.b32.cont [10/16] 0.0, 128
      %306 = vxpose.xlu0.b32.cont [11/16] 0.0, 128
      %307 = vxpose.xlu0.b32.cont [12/16] 0.0, 128
      %308 = vxpose.xlu0.b32.cont [13/16] 0.0, 128
      %309 = vxpose.xlu0.b32.cont [14/16] 0.0, 128
      %310 = vxpose.xlu0.b32.cont [15/16] 0.0, 128
      %311 = vxpose.xlu0.b32.end [16/16] 0.0, 128
      %v312 = vpop.trf.xlu0
      %v313 = vpop.trf.xlu0
      %v314 = vpop.trf.xlu0
      %v315 = vpop.trf.xlu0
      %v316 = vpop.trf.xlu0
      %v317 = vpop.trf.xlu0
      %v318 = vpop.trf.xlu0
      %v319 = vpop.trf.xlu0
      %v320 = vpop.trf.xlu0
      %v321 = vpop.trf.xlu0
      %v322 = vpop.trf.xlu0
      %v323 = vpop.trf.xlu0
      %v324 = vpop.trf.xlu0
      %v325 = vpop.trf.xlu0
      %v326 = vpop.trf.xlu0
      %v327 = vpop.trf.xlu0
      %v329 = vsel %vm112, %v312, 0
      %v332 = vsel %vm112, %v313, 0
      %v335 = vsel %vm112, %v314, 0
      %v338 = vsel %vm112, %v315, 0
      %340 = vmatpush.msra.mxu0 0.0
      %341 = vmatpush.msra.mxu0 0.0
      %342 = vmatpush.msra.mxu0 0.0
      %343 = vmatpush.msra.mxu0 0.0
      %344 = vmatpush.msra.mxu0 0.0
      %345 = vmatpush.msra.mxu0 0.0
      %346 = vmatpush.msra.mxu0 0.0
      %347 = vmatpush.msra.mxu0 0.0
      %348 = vmatpush.msra.mxu0 0.0
      %349 = vmatpush.msra.mxu0 0.0
      %350 = vmatpush.msra.mxu0 0.0
      %351 = vmatpush.msra.mxu0 0.0
      %352 = vmatpush.msra.mxu0 0.0
      %353 = vmatpush.msra.mxu0 0.0
      %354 = vmatpush.msra.mxu0 0.0
      %355 = vmatpush.msra.mxu0 %v295
      %356 = vmatmul.f32.gmra.mxu0 %v329
      %v357 = vpop.f32.mrf.mxu0
      %v358 = vadd.f32 0.0, %v357
      %359 = vmatmul.f32.gmra.mxu0 %v332
      %v360 = vpop.f32.mrf.mxu0
      %v361 = vadd.f32 0.0, %v360
      %362 = vmatmul.f32.gmra.mxu0 %v335
      %v363 = vpop.f32.mrf.mxu0
      %v364 = vadd.f32 0.0, %v363
      %365 = vmatmul.f32.gmra.mxu0 %v338
      %v366 = vpop.f32.mrf.mxu0
      %v367 = vadd.f32 0.0, %v366
      %368 = vdwg.mxu0
      %v369 = vld [vmem:[#allocation4] sm:$0xff]
      %v370 = vld [vmem:[#allocation4 + $0x8] sm:$0xff]
      %v371 = vld [vmem:[#allocation4 + $0x10] sm:$0xff]
      %v372 = vld [vmem:[#allocation4 + $0x18] sm:$0xff]
      %v373 = vadd.f32 %v369, %v358
      %v374 = vadd.f32 %v370, %v361
      %v375 = vadd.f32 %v371, %v364
      %v376 = vadd.f32 %v372, %v367
      %v377 = vmul.f32 %v373, 0.14285715
      %v378 = vmul.f32 %v374, 0.14285715
      %v379 = vmul.f32 %v375, 0.14285715
      %v380 = vmul.f32 %v376, 0.14285715
      %v381 = vmul.f32 %v377, %v377
      %v382 = vmul.f32 %v378, %v378
      %v383 = vmul.f32 %v379, %v379
      %v384 = vmul.f32 %v380, %v380
      %v385 = vsel %vm55, %v381, 0.0
      %v386 = vsel %vm55, %v382, 0.0
      %v387 = vadd.f32 %v385, %v386
      %v388 = vsel %vm55, %v383, 0.0
      %v389 = vadd.f32 %v387, %v388
      %v390 = vsel %vm55, %v384, 0.0
      %v391 = vadd.f32 %v389, %v390
      %392 = vadd.xlane.f32.xlu0 %v391
      %v393 = vpop.xlane.xlu0 %392
      %v394 = vrot.slane %v393, 4
      %v395 = vadd.f32 %v393, %v394
      %v396 = vrot.slane %v395, 2
      %v397 = vadd.f32 %v395, %v396
      %v398 = vrot.slane %v397, 1
      %v399 = vadd.f32 %v397, %v398
      %s400 = vtos %v399
      %v401 = vrcp.pop 1024.0
      %v402 = vmul.f32 1024.0, %v401
      %v403 = vsub.f32 1.0, %v402
      %v404 = vmul.f32 %v401, %v403
      %v405 = vadd.f32 %v401, %v404
      %vm406 = vweird.f32 %v401
      %v407 = vsel %vm406, %v401, %v405
      %s408 = vtos %v407
      %s409 = smul.f32 %s400, %s408
      %s410 = sadd.f32 %s281, %s409
      %s411 = scalar_lea.smem [#allocation10], 0
      %412 = sst [smem:[%s411]] %s410
    $region25: #{tpu_custom_call.1} parent=1 // pred_fallthru
      _
    // Predicated region
    $region26: #{tpu_custom_call.1} parent=1 // pred_check
      _
    $region27: #{tpu_custom_call.1} parent=1 // pred_check_branch
      %414 = sbr.rel (0) target = $region29
    $region28: #{tpu_custom_call.1} parent=1 // pred_region
      %416 = vsyncadd [#allocation7], 0
      %s418 = sshll.u32 %s2, 4
      %s419 = int_to_ptr.hbm [resolvable:$true] %s418
      %421 = dma.smem_to_hbm [#allocation10], 16, %s419, [#allocation7]
    $region29: #{tpu_custom_call.1} parent=1 // pred_fallthru
      _
    // Predicated region
    $region30: #{tpu_custom_call.1} parent=1 // pred_check
      _
    $region31: #{tpu_custom_call.1} parent=1 // pred_check_branch
      %423 = sbr.rel (0) target = $region33
    $region32: #{tpu_custom_call.1} parent=1 // pred_region
      %425 = dma.done [#allocation7], 16
    $region33: #{tpu_custom_call.1} parent=1 // pred_fallthru
      _
    %426 = sfence
    %427 = vsyncpa [#allocation6], 1
    %428 = vsyncpa [#allocation9], 1
    %429 = vsyncpa [#allocation7], 1

</llo_original>
